<compile_context>
chip_gen: v6e
topology: v6e:2x2x1
jax: 0.10.0
libtpu: 0.0.40
codegen_flags: <defaults>
</compile_context>

<pallas_src>
import jax
import jax.numpy as jnp
from jax.experimental import pallas as pl
from jax.experimental.pallas import tpu as pltpu


# ----------------------------------------------------------------------------- kernel
def decoder_fused_kernel(tok_ref,     # SMEM (T,)      int32 -- token ids
                         hc0_ref,     # VMEM (2, H)    f32   -- initial [h0 ; c0]
                         emb_ref,     # VMEM (O, 1, E) f32   -- embedding table (resident)
                         w_ih_ref,    # VMEM (E, 4H)   bf16  -- W_ih^T
                         w_hh_ref,    # VMEM (H, 4H)   bf16  -- W_hh^T
                         bg_ref,      # VMEM (1, 4H)   f32   -- b_ih + b_hh
                         wo_ref,      # VMEM (H, O)    bf16  -- out Linear W^T
                         bo_ref,      # VMEM (1, O)    f32   -- out Linear bias
                         logits_ref,  # VMEM (T, O)    f32   -- all logits (one store)
                         hc_ref):     # VMEM (2, H)    f32   -- final [h ; c] (one store)
    T = logits_ref.shape[0]
    H = hc0_ref.shape[1]

    # ---- batched input path (outside the serial recurrence) ------------------
    # Gather all T embedding rows from the VMEM-resident table using the SMEM
    # token ids (dynamic leading-axis indexing; no per-step DMA descriptors).
    x = jnp.concatenate([emb_ref[tok_ref[t]] for t in range(T)], axis=0)   # (T, E) f32
    # One (T,E)x(E,4H) MXU matmul; the fused LSTM bias is folded in here.
    g_in = (jnp.dot(x.astype(jnp.bfloat16), w_ih_ref[...],
                    preferred_element_type=jnp.float32)
            + bg_ref[...])                                                  # (T, 4H) f32

    # ---- serial recurrence with register-carried h / c ------------------------
    h = hc0_ref[0:1, :]                                                     # (1, H) f32
    c = hc0_ref[1:2, :]                                                     # (1, H) f32
    w_hh = w_hh_ref[...]                                                    # load once
    h_rows = []
    for t in range(T):   # small fixed T -> static unroll (single basic block)
        gates = (jnp.dot(h.astype(jnp.bfloat16), w_hh,
                         preferred_element_type=jnp.float32)
                 + g_in[t:t + 1, :])                                        # (1, 4H) f32
        # PyTorch LSTM gate order: input, forget, cell(g), output.
        i = jax.nn.sigmoid(gates[:, 0:H])
        f = jax.nn.sigmoid(gates[:, H:2 * H])
        g = jnp.tanh(gates[:, 2 * H:3 * H])
        o = jax.nn.sigmoid(gates[:, 3 * H:4 * H])
        c = f * c + i * g
        h = o * jnp.tanh(c)
        h_rows.append(h)

    # ---- batched output projection + single lane-dense stores -----------------
    h_all = jnp.concatenate(h_rows, axis=0)                                 # (T, H) f32
    logits_ref[...] = (jnp.dot(h_all.astype(jnp.bfloat16), wo_ref[...],
                               preferred_element_type=jnp.float32)
                       + bo_ref[...])                                       # (T, O)
    hc_ref[...] = jnp.concatenate([h, c], axis=0)                           # (2, H)


# ----------------------------------------------------------------------------- wrappers
def decoder_steps(params, tokens, hidden):
    """Run T teacher-forced decode steps in ONE pallas_call (no grid).

    tokens: (T,) int32; hidden: (h0, c0) each (1, 1, H).
    Returns (logits (T, O), (h_T, c_T) each (1, 1, H))."""
    h0, c0 = hidden
    H = h0.shape[-1]
    O, _, E = params["emb3"].shape
    T = int(tokens.shape[0])

    # Clamp ids: in-kernel dynamic indexing of a VMEM ref has no bounds check.
    tokens = jnp.clip(tokens.astype(jnp.int32), 0, O - 1)
    hc0 = jnp.concatenate([h0.reshape(1, H), c0.reshape(1, H)], axis=0)     # (2, H)

    vmem = pl.BlockSpec(memory_space=pltpu.MemorySpace.VMEM)
    smem = pl.BlockSpec(memory_space=pltpu.MemorySpace.SMEM)

    logits, hc = pl.pallas_call(
        decoder_fused_kernel,
        out_shape=(
            jax.ShapeDtypeStruct((T, O), jnp.float32),
            jax.ShapeDtypeStruct((2, H), jnp.float32),
        ),
        in_specs=[smem,                  # token ids
                  vmem,                  # [h0 ; c0]
                  vmem,                  # embedding table (O, 1, E)
                  vmem, vmem, vmem,      # W_ih^T, W_hh^T, fused gate bias
                  vmem, vmem],           # W_out^T, b_out
        out_specs=(vmem, vmem),
    )(
        tokens, hc0, params["emb3"],
        params["w_ih"], params["w_hh"], params["b_gates"],
        params["w_out"], params["b_out"],
    )

    h_new = hc[0:1].reshape(1, 1, H)
    c_new = hc[1:2].reshape(1, 1, H)
    return logits, (h_new, c_new)


def decoder_forward(params, token, hidden):
    """Mirrors Decoder.forward(input, hidden): single token -> ((1, O), (h, c))."""
    tokens = jnp.asarray(token, dtype=jnp.int32).reshape(1)
    logits, new_hidden = decoder_steps(params, tokens, hidden)
    return logits.reshape(-1, logits.shape[-1]), new_hidden


def init_hidden(params, z, condition):
    """Mirrors Decoder.initHidden: one tiny Linear -- plain-JAX glue (not hot path)."""
    H = params["l2h_w"].shape[0]
    zc = jnp.concatenate((z, condition), axis=2)                            # (1, 1, latent+cond)
    h0 = jnp.einsum("abk,hk->abh", zc, params["l2h_w"]) + params["l2h_b"]
    c0 = jnp.zeros((1, 1, H), dtype=jnp.float32)
    return h0, c0


# ----------------------------------------------------------------------------- params
def make_params(key, output_dim, embedding_dim, hidden_dim, condition_dim, latent_dim):
    """PyTorch-layout parameters (as nn.Embedding / nn.LSTM / nn.Linear store them)."""
    H = hidden_dim + condition_dim
    ks = jax.random.split(key, 9)
    u = lambda k, shape, s: jax.random.uniform(k, shape, jnp.float32, -s, s)
    s_lstm = 1.0 / jnp.sqrt(H)
    s_in = 1.0 / jnp.sqrt(latent_dim + condition_dim)
    return {
        "embedding": jax.random.normal(ks[0], (output_dim, embedding_dim), jnp.float32),
        "lstm_w_ih": u(ks[1], (4 * H, embedding_dim), s_lstm),
        "lstm_w_hh": u(ks[2], (4 * H, H), s_lstm),
        "lstm_b_ih": u(ks[3], (4 * H,), s_lstm),
        "lstm_b_hh": u(ks[4], (4 * H,), s_lstm),
        "out_w": u(ks[5], (output_dim, H), s_lstm),
        "out_b": u(ks[6], (output_dim,), s_lstm),
        "l2h_w": u(ks[7], (H, latent_dim + condition_dim), s_in),
        "l2h_b": u(ks[8], (H,), s_in),
    }


def prepare_decoder_params(raw):
    """One-time weight prep hoisted out of the hot path: transposes, b_ih+b_hh
       fusion, bf16 casts for MXU operands, (O,1,E) embedding view for in-kernel
       leading-axis gather."""
    H4 = raw["lstm_w_ih"].shape[0]
    O, E = raw["embedding"].shape
    emb = raw["embedding"].astype(jnp.float32)
    return {
        "embedding": emb,                                                   # (O, E)   f32 (reference)
        "emb3": emb.reshape(O, 1, E),                                       # (O, 1, E) f32 (kernel)
        "w_ih": raw["lstm_w_ih"].T.astype(jnp.bfloat16),                    # (E, 4H)  bf16
        "w_hh": raw["lstm_w_hh"].T.astype(jnp.bfloat16),                    # (H, 4H)  bf16
        "b_gates": (raw["lstm_b_ih"] + raw["lstm_b_hh"]).reshape(1, H4).astype(jnp.float32),
        "w_out": raw["out_w"].T.astype(jnp.bfloat16),                       # (H, O)   bf16
        "b_out": raw["out_b"].reshape(1, O).astype(jnp.float32),
        "l2h_w": raw["l2h_w"],
        "l2h_b": raw["l2h_b"],
    }


# ----------------------------------------------------------------------------- pure-JAX reference
def decoder_steps_ref(params, tokens, hidden):
    H = hidden[0].shape[-1]
    O, E = params["embedding"].shape
    h = hidden[0].reshape(1, H)
    c = hidden[1].reshape(1, H)
    toks = jnp.clip(tokens.astype(jnp.int32), 0, O - 1)
    x = params["embedding"][toks]                                           # (T, E)
    g_in = (jnp.dot(x.astype(jnp.bfloat16), params["w_ih"],
                    preferred_element_type=jnp.float32) + params["b_gates"])
    h_rows = []
    for t in range(tokens.shape[0]):
        gates = (jnp.dot(h.astype(jnp.bfloat16), params["w_hh"],
                         preferred_element_type=jnp.float32) + g_in[t:t + 1, :])
        i = jax.nn.sigmoid(gates[:, 0:H])
        f = jax.nn.sigmoid(gates[:, H:2 * H])
        g = jnp.tanh(gates[:, 2 * H:3 * H])
        o = jax.nn.sigmoid(gates[:, 3 * H:4 * H])
        c = f * c + i * g
        h = o * jnp.tanh(c)
        h_rows.append(h)
    h_all = jnp.concatenate(h_rows, axis=0)
    logits = (jnp.dot(h_all.astype(jnp.bfloat16), params["w_out"],
                      preferred_element_type=jnp.float32) + params["b_out"])
    return logits, (h.reshape(1, 1, H), c.reshape(1, 1, H))


# ----------------------------------------------------------------------------- main
if __name__ == "__main__":
    output_dim, embedding_dim, hidden_dim, condition_dim, latent_dim = 32, 16, 24, 8, 16
    H = hidden_dim + condition_dim                    # 32 -> gate width 4H = 128 lanes

    key = jax.random.PRNGKey(0)
    kp, kz, kc, kt = jax.random.split(key, 4)
    raw = make_params(kp, output_dim, embedding_dim, hidden_dim, condition_dim, latent_dim)
    params = prepare_decoder_params(raw)              # one-time prep, outside the hot path

    z = jax.random.normal(kz, (1, 1, latent_dim), jnp.float32)
    condition = jax.random.normal(kc, (1, 1, condition_dim), jnp.float32)
    hidden = init_hidden(params, z, condition)        # (h0, c0), each (1, 1, H)

    # (a) single-step forward, exactly mirroring Decoder.forward(input, hidden)
    token = jnp.array([3], dtype=jnp.int32)
    output, (h1, c1) = decoder_forward(params, token, hidden)
    jax.block_until_ready((output, h1, c1))
    assert output.shape == (1, output_dim)
    assert h1.shape == (1, 1, H) and c1.shape == (1, 1, H)

    # (b) fused teacher-forced decode: T steps in ONE kernel invocation
    T = 8
    tokens = jax.random.randint(kt, (T,), 0, output_dim, dtype=jnp.int32)
    logits, (hT, cT) = decoder_steps(params, tokens, hidden)
    jax.block_until_ready((logits, hT, cT))
    assert logits.shape == (T, output_dim)

    # Correctness check against a pure-JAX reference using the same (bf16) weights.
    logits_ref, (hT_ref, cT_ref) = decoder_steps_ref(params, tokens, hidden)
    assert bool(jnp.allclose(logits, logits_ref, rtol=2e-2, atol=2e-2))
    assert bool(jnp.allclose(hT, hT_ref, rtol=2e-2, atol=2e-2))
    assert bool(jnp.allclose(cT, cT_ref, rtol=2e-2, atol=2e-2))

    print("KERNEL_OK")
</pallas_src>

<mosaic_0001>
module attributes {stable_mosaic.version = 11 : i64} {
  func.func @decoder_fused_kernel(%arg0: memref<1xi32, #tpu.memory_space<smem>>, %arg1: memref<2x32xf32, #tpu.memory_space<vmem>>, %arg2: memref<32x1x16xf32, #tpu.memory_space<vmem>>, %arg3: memref<16x128xbf16, #tpu.memory_space<vmem>>, %arg4: memref<32x128xbf16, #tpu.memory_space<vmem>>, %arg5: memref<1x128xf32, #tpu.memory_space<vmem>>, %arg6: memref<32x32xbf16, #tpu.memory_space<vmem>>, %arg7: memref<1x32xf32, #tpu.memory_space<vmem>>, %arg8: memref<1x32xf32, #tpu.memory_space<vmem>>, %arg9: memref<2x32xf32, #tpu.memory_space<vmem>>) attributes {dimension_semantics = [], scalar_prefetch = 0 : i64, scratch_operands = 0 : i64, tpu.core_type = #tpu.core_type<tc>} {
    %c0 = arith.constant 0 : index
    %0 = memref.load %arg0[%c0] : memref<1xi32, #tpu.memory_space<smem>>
    %1 = arith.index_cast %0 : i32 to index
    %c0_0 = arith.constant 0 : index
    %c0_1 = arith.constant 0 : index
    %2 = vector.load %arg2[%1, %c0_0, %c0_1] : memref<32x1x16xf32, #tpu.memory_space<vmem>>, vector<1x1x16xf32>
    %3 = vector.shape_cast %2 : vector<1x1x16xf32> to vector<1x16xf32>
    %4 = arith.truncf %3 : vector<1x16xf32> to vector<1x16xbf16>
    %c0_2 = arith.constant 0 : index
    %c0_3 = arith.constant 0 : index
    %5 = vector.load %arg3[%c0_2, %c0_3] : memref<16x128xbf16, #tpu.memory_space<vmem>>, vector<16x128xbf16>
    %cst = arith.constant dense<0.000000e+00> : vector<1x128xf32>
    %6 = tpu.matmul %4, %5, %cst {dimension_numbers = #tpu.dot_dimension_numbers<[1], [0], [0], [1], [0, 0, 1, 1], [], []>} : vector<1x16xbf16>, vector<16x128xbf16>, vector<1x128xf32> -> vector<1x128xf32>
    %c0_4 = arith.constant 0 : index
    %c0_5 = arith.constant 0 : index
    %7 = vector.load %arg5[%c0_4, %c0_5] : memref<1x128xf32, #tpu.memory_space<vmem>>, vector<1x128xf32>
    %8 = arith.addf %6, %7 : vector<1x128xf32>
    %c0_6 = arith.constant 0 : index
    %c0_7 = arith.constant 0 : index
    %9 = vector.load %arg1[%c0_6, %c0_7] : memref<2x32xf32, #tpu.memory_space<vmem>>, vector<1x32xf32>
    %c1 = arith.constant 1 : index
    %c0_8 = arith.constant 0 : index
    %10 = vector.load %arg1[%c1, %c0_8] : memref<2x32xf32, #tpu.memory_space<vmem>>, vector<1x32xf32>
    %c0_9 = arith.constant 0 : index
    %c0_10 = arith.constant 0 : index
    %11 = vector.load %arg4[%c0_9, %c0_10] : memref<32x128xbf16, #tpu.memory_space<vmem>>, vector<32x128xbf16>
    %12 = arith.truncf %9 : vector<1x32xf32> to vector<1x32xbf16>
    %cst_11 = arith.constant dense<0.000000e+00> : vector<1x128xf32>
    %13 = tpu.matmul %12, %11, %cst_11 {dimension_numbers = #tpu.dot_dimension_numbers<[1], [0], [0], [1], [0, 0, 1, 1], [], []>} : vector<1x32xbf16>, vector<32x128xbf16>, vector<1x128xf32> -> vector<1x128xf32>
    %14 = arith.addf %13, %8 : vector<1x128xf32>
    %15 = vector.extract_strided_slice %14 {offsets = [0, 0], sizes = [1, 32], strides = [1, 1]} : vector<1x128xf32> to vector<1x32xf32>
    %16 = arith.negf %15 : vector<1x32xf32>
    %17 = math.exp %16 : vector<1x32xf32>
    %cst_12 = arith.constant 1.000000e+00 : f32
    %18 = vector.broadcast %cst_12 : f32 to vector<1x32xf32>
    %19 = arith.addf %18, %17 : vector<1x32xf32>
    %20 = arith.divf %18, %19 : vector<1x32xf32>
    %21 = vector.extract_strided_slice %14 {offsets = [0, 32], sizes = [1, 32], strides = [1, 1]} : vector<1x128xf32> to vector<1x32xf32>
    %22 = arith.negf %21 : vector<1x32xf32>
    %23 = math.exp %22 : vector<1x32xf32>
    %cst_13 = arith.constant 1.000000e+00 : f32
    %24 = vector.broadcast %cst_13 : f32 to vector<1x32xf32>
    %25 = arith.addf %24, %23 : vector<1x32xf32>
    %26 = arith.divf %24, %25 : vector<1x32xf32>
    %27 = vector.extract_strided_slice %14 {offsets = [0, 64], sizes = [1, 32], strides = [1, 1]} : vector<1x128xf32> to vector<1x32xf32>
    %28 = math.tanh %27 : vector<1x32xf32>
    %29 = vector.extract_strided_slice %14 {offsets = [0, 96], sizes = [1, 32], strides = [1, 1]} : vector<1x128xf32> to vector<1x32xf32>
    %30 = arith.negf %29 : vector<1x32xf32>
    %31 = math.exp %30 : vector<1x32xf32>
    %cst_14 = arith.constant 1.000000e+00 : f32
    %32 = vector.broadcast %cst_14 : f32 to vector<1x32xf32>
    %33 = arith.addf %32, %31 : vector<1x32xf32>
    %34 = arith.divf %32, %33 : vector<1x32xf32>
    %35 = arith.mulf %26, %10 : vector<1x32xf32>
    %36 = arith.mulf %20, %28 : vector<1x32xf32>
    %37 = arith.addf %35, %36 : vector<1x32xf32>
    %38 = math.tanh %37 : vector<1x32xf32>
    %39 = arith.mulf %34, %38 : vector<1x32xf32>
    %40 = arith.truncf %39 : vector<1x32xf32> to vector<1x32xbf16>
    %c0_15 = arith.constant 0 : index
    %c0_16 = arith.constant 0 : index
    %41 = vector.load %arg6[%c0_15, %c0_16] : memref<32x32xbf16, #tpu.memory_space<vmem>>, vector<32x32xbf16>
    %cst_17 = arith.constant dense<0.000000e+00> : vector<1x32xf32>
    %42 = tpu.matmul %40, %41, %cst_17 {dimension_numbers = #tpu.dot_dimension_numbers<[1], [0], [0], [1], [0, 0, 1, 1], [], []>} : vector<1x32xbf16>, vector<32x32xbf16>, vector<1x32xf32> -> vector<1x32xf32>
    %c0_18 = arith.constant 0 : index
    %c0_19 = arith.constant 0 : index
    %43 = vector.load %arg7[%c0_18, %c0_19] : memref<1x32xf32, #tpu.memory_space<vmem>>, vector<1x32xf32>
    %44 = arith.addf %42, %43 : vector<1x32xf32>
    %c0_20 = arith.constant 0 : index
    %c0_21 = arith.constant 0 : index
    %45 = vector.load %arg8[%c0_20, %c0_21] : memref<1x32xf32, #tpu.memory_space<vmem>>, vector<1x32xf32>
    tpu.vector_store %arg8[%c0_20, %c0_21], %44 {strides = array<i32>} : memref<1x32xf32, #tpu.memory_space<vmem>>, vector<1x32xf32>,
    %46 = tpu.concatenate %39, %37 in 0 : vector<1x32xf32>, vector<1x32xf32> -> vector<2x32xf32>
    %c0_22 = arith.constant 0 : index
    %c0_23 = arith.constant 0 : index
    %47 = vector.load %arg9[%c0_22, %c0_23] : memref<2x32xf32, #tpu.memory_space<vmem>>, vector<2x32xf32>
    tpu.vector_store %arg9[%c0_22, %c0_23], %46 {strides = array<i32>} : memref<2x32xf32, #tpu.memory_space<vmem>>, vector<2x32xf32>,
    return
  }
}

</mosaic_0001>

<llo_original>
// kernel: tpu_custom_call.1
$region0: #{tpu_custom_call.1}
  #allocation0 [shape = 'u32[]', space=smem, size = 0x4, offset = 0x4, fixed_abs, tag = 'smem constant byte address 0x4 - core index']
  #allocation1 [shape = 'u32[144,128]{1,0:T(1,128)}', space=vmem, size = 0x12000, scoped, tag = 'internal scratch']
  #allocation2 [shape = 's32[1]{0:T(128)S(6)}', space=smem, size = 0x200, scoped, tag = 'scoped memory for tpu_custom_call.1']
  %s0 = inlined_call_operand.<no memory space> [shape: s32[1], index: 0, kind: input, shape index: {}]
  %s1 = inlined_call_operand.vmem [shape: f32[2,32], index: 1, kind: input, shape index: {}]
  %s2 = inlined_call_operand.vmem [shape: f32[32,1,16], index: 2, kind: input, shape index: {}]
  %s3 = inlined_call_operand.vmem [shape: bf16[16,128], index: 3, kind: input, shape index: {}]
  %s4 = inlined_call_operand.vmem [shape: bf16[32,128], index: 4, kind: input, shape index: {}]
  %s5 = inlined_call_operand.vmem [shape: f32[1,128], index: 5, kind: input, shape index: {}]
  %s6 = inlined_call_operand.vmem [shape: bf16[32,32], index: 6, kind: input, shape index: {}]
  %s7 = inlined_call_operand.vmem [shape: f32[1,32], index: 7, kind: input, shape index: {}]
  %s8 = inlined_call_operand.hbm [shape: f32[1,32], index: 8, kind: output, shape index: {0}]
  %s9 = inlined_call_operand.hbm [shape: f32[2,32], index: 9, kind: output, shape index: {1}]
  %10 = xla_tuple %s8, %s9
  %s11 = sld [smem:[#allocation0]]
  $region50: #{tpu_custom_call.1} parent=0
    _
  %s13 = ssub.s32 1, %s11
  %s14 = scalar_select 0, %s13, %s11
  %15 = sst [smem:[#allocation2]] %s0
  $region1: #{tpu_custom_call.1} parent=0
    #allocation3 [shape = 'u8[512]{0}', space=vmem, size = 0x400, scoped, tag = 'output window, operand 0, single buffered']
    #allocation4 [shape = 's32[1]{0}', space=sflag, size = 0x4, scoped, tag = 'scoped memory for tpu_custom_call.1']
    #allocation5 [shape = 'u8[1024]{0}', space=vmem, size = 0x400, scoped, tag = 'output window, operand 1, single buffered']
    #allocation6 [shape = 's32[1]{0}', space=sflag, size = 0x4, scoped, tag = 'scoped memory for tpu_custom_call.1']
    %16 = vsyncpa [#allocation4], 0
    %17 = vsyncpa [#allocation6], 0
    // Predicated region
    $region2: #{tpu_custom_call.1} parent=1 // pred_check
      _
    $region3: #{tpu_custom_call.1} parent=1 // pred_check_branch
      %19 = sbr.rel (0) target = $region5
    $region4: #{tpu_custom_call.1} parent=1 // pred_region
      _
    $region5: #{tpu_custom_call.1} parent=1 // pred_fallthru
      _
    // Predicated region
    $region6: #{tpu_custom_call.1} parent=1 // pred_check
      _
    $region7: #{tpu_custom_call.1} parent=1 // pred_check_branch
      %21 = sbr.rel (0) target = $region9
    $region8: #{tpu_custom_call.1} parent=1 // pred_region
      _
    $region9: #{tpu_custom_call.1} parent=1 // pred_fallthru
      _
    // Predicated region
    $region10: #{tpu_custom_call.1} parent=1 // pred_check
      _
    $region11: #{tpu_custom_call.1} parent=1 // pred_check_branch
      %23 = sbr.rel (0) target = $region13
    $region12: #{tpu_custom_call.1} parent=1 // pred_region
      _
    $region13: #{tpu_custom_call.1} parent=1 // pred_fallthru
      _
    // Predicated region
    $region14: #{tpu_custom_call.1} parent=1 // pred_check
      _
    $region15: #{tpu_custom_call.1} parent=1 // pred_check_branch
      %25 = sbr.rel (0) target = $region17
    $region16: #{tpu_custom_call.1} parent=1 // pred_region
      _
    $region17: #{tpu_custom_call.1} parent=1 // pred_fallthru
      _
    // Predicated region
    $region18: #{tpu_custom_call.1} parent=1 // pred_check
      _
    $region19: #{tpu_custom_call.1} parent=1 // pred_check_branch
      %27 = sbr.rel (0) target = $region21
    $region20: #{tpu_custom_call.1} parent=1 // pred_region
      _
    $region21: #{tpu_custom_call.1} parent=1 // pred_fallthru
      _
    // Predicated region
    $region22: #{tpu_custom_call.1} parent=1 // pred_check
      _
    $region23: #{tpu_custom_call.1} parent=1 // pred_check_branch
      %29 = sbr.rel (0) target = $region25
    $region24: #{tpu_custom_call.1} parent=1 // pred_region
      _
    $region25: #{tpu_custom_call.1} parent=1 // pred_fallthru
      _
    // Predicated region
    $region26: #{tpu_custom_call.1} parent=1 // pred_check
      _
    $region27: #{tpu_custom_call.1} parent=1 // pred_check_branch
      %31 = sbr.rel (0) target = $region29
    $region28: #{tpu_custom_call.1} parent=1 // pred_region
      _
    $region29: #{tpu_custom_call.1} parent=1 // pred_fallthru
      _
    // Predicated region
    $region30: #{tpu_custom_call.1} parent=1 // pred_check
      _
    $region31: #{tpu_custom_call.1} parent=1 // pred_check_branch
      %33 = sbr.rel (0) target = $region33
    $region32: #{tpu_custom_call.1} parent=1 // pred_region
      _
    $region33: #{tpu_custom_call.1} parent=1 // pred_fallthru
      _
    %s35 = sld [smem:[#allocation2]]
    %s36 = scalar_lea.vmem %s2, %s35
    %v37 = vld [vmem:[%s36] sm:$0x1]
    %v38 = vpack.c.bf16 %v37, %v37
    %v39 = vld [vmem:[%s3] sm:$0xf]
    %v40 = vld [vmem:[%s3 + $0x4] sm:$0xf]
    %v41 = vld [vmem:[%s5] sm:$0x1]
    %v44 = vunpack.c.l.b16 %v39
    %v45 = vunpack.c.l.b16 %v40
    %v46 = vpack.c.b16 %v45, %v44
    %vm48 = vcmask 130048
    %v50 = vsel %vm48, %v38, 0
    %52 = vmatprep.subr.bf16.mxu0 0
    %53 = vmatpush1.bf16.msra.mxu0 0
    %54 = vmatprep.subr.bf16.mxu0 0
    %55 = vmatpush1.bf16.msra.mxu0 0
    %56 = vmatprep.subr.bf16.mxu0 0
    %57 = vmatpush1.bf16.msra.mxu0 0
    %58 = vmatprep.subr.bf16.mxu0 0
    %59 = vmatpush1.bf16.msra.mxu0 0
    %60 = vmatprep.subr.bf16.mxu0 0
    %61 = vmatpush1.bf16.msra.mxu0 0
    %62 = vmatprep.subr.bf16.mxu0 0
    %63 = vmatpush1.bf16.msra.mxu0 0
    %64 = vmatprep.subr.bf16.mxu0 0
    %65 = vmatpush1.bf16.msra.mxu0 0
    %66 = vmatprep.subr.bf16.mxu0 0
    %67 = vmatpush1.bf16.msra.mxu0 %v46
    %68 = vmatprep.subr.bf16.mxu0 0
    %69 = vmatpush2.bf16.msra.mxu0 0
    %70 = vmatprep.subr.bf16.mxu0 0
    %71 = vmatpush2.bf16.msra.mxu0 0
    %72 = vmatprep.subr.bf16.mxu0 0
    %73 = vmatpush2.bf16.msra.mxu0 0
    %74 = vmatprep.subr.bf16.mxu0 0
    %75 = vmatpush2.bf16.msra.mxu0 0
    %76 = vmatprep.subr.bf16.mxu0 0
    %77 = vmatpush2.bf16.msra.mxu0 0
    %78 = vmatprep.subr.bf16.mxu0 0
    %79 = vmatpush2.bf16.msra.mxu0 0
    %80 = vmatprep.subr.bf16.mxu0 0
    %81 = vmatpush2.bf16.msra.mxu0 0
    %82 = vmatprep.subr.bf16.mxu0 0
    %83 = vmatpush2.bf16.msra.mxu0 0
    %84 = vmatprep.mubr.bf16.mxu0 0
    %85 = vmatmul.mubr.bf16.gmra.mxu0 %v50
    %v86 = vpop.f32.mrf.mxu0
    %v87 = vadd.f32 %v41, %v86
    %v88 = vpop.f32.mrf.mxu0
    %v89 = vpop.f32.mrf.mxu0
    %v90 = vpop.f32.mrf.mxu0
    %91 = vdwg.mxu0
    %v92 = vld [vmem:[%s1] sm:$0x1]
    %v93 = vld [vmem:[%s1 + $0x1] sm:$0x1]
    %v94 = vld [vmem:[%s4] sm:$0xf]
    %v95 = vld [vmem:[%s4 + $0x4] sm:$0xf]
    %v96 = vld [vmem:[%s4 + $0x8] sm:$0xf]
    %v97 = vld [vmem:[%s4 + $0xc] sm:$0xf]
    %v98 = vpack.c.bf16 %v92, %v92
    %v103 = vunpack.c.l.b16 %v94
    %v104 = vunpack.c.l.b16 %v95
    %v105 = vunpack.c.l.b16 %v96
    %v106 = vunpack.c.l.b16 %v97
    %v107 = vpack.c.b16 %v104, %v103
    %v108 = vpack.c.b16 %v106, %v105
    %vm111 = vcmask 261120
    %v113 = vsel %vm111, %v98, 0
    %115 = vmatprep.subr.bf16.mxu0 0
    %116 = vmatpush1.bf16.msra.mxu0 0
    %117 = vmatprep.subr.bf16.mxu0 0
    %118 = vmatpush1.bf16.msra.mxu0 0
    %119 = vmatprep.subr.bf16.mxu0 0
    %120 = vmatpush1.bf16.msra.mxu0 0
    %121 = vmatprep.subr.bf16.mxu0 0
    %122 = vmatpush1.bf16.msra.mxu0 0
    %123 = vmatprep.subr.bf16.mxu0 0
    %124 = vmatpush1.bf16.msra.mxu0 0
    %125 = vmatprep.subr.bf16.mxu0 0
    %126 = vmatpush1.bf16.msra.mxu0 0
    %127 = vmatprep.subr.bf16.mxu0 0
    %128 = vmatpush1.bf16.msra.mxu0 %v108
    %129 = vmatprep.subr.bf16.mxu0 0
    %130 = vmatpush1.bf16.msra.mxu0 %v107
    %131 = vmatprep.subr.bf16.mxu0 0
    %132 = vmatpush2.bf16.msra.mxu0 0
    %133 = vmatprep.subr.bf16.mxu0 0
    %134 = vmatpush2.bf16.msra.mxu0 0
    %135 = vmatprep.subr.bf16.mxu0 0
    %136 = vmatpush2.bf16.msra.mxu0 0
    %137 = vmatprep.subr.bf16.mxu0 0
    %138 = vmatpush2.bf16.msra.mxu0 0
    %139 = vmatprep.subr.bf16.mxu0 0
    %140 = vmatpush2.bf16.msra.mxu0 0
    %141 = vmatprep.subr.bf16.mxu0 0
    %142 = vmatpush2.bf16.msra.mxu0 0
    %143 = vmatprep.subr.bf16.mxu0 0
    %144 = vmatpush2.bf16.msra.mxu0 0
    %145 = vmatprep.subr.bf16.mxu0 0
    %146 = vmatpush2.bf16.msra.mxu0 0
    %147 = vmatprep.mubr.bf16.mxu0 0
    %148 = vmatmul.mubr.bf16.gmra.mxu0 %v113
    %v149 = vpop.f32.mrf.mxu0
    %v150 = vadd.f32 %v87, %v149
    %v151 = vpop.f32.mrf.mxu0
    %v152 = vpop.f32.mrf.mxu0
    %v153 = vpop.f32.mrf.mxu0
    %154 = vdwg.mxu0
    %v155 = vxor.u32 %v150, 2147483648
    %v156 = vmul.f32 %v155, 1.442695
    %v157 = vpow.pop %v156
    %v158 = vadd.f32 %v157, 1.0
    %v159 = vrcp.pop %v158
    %v160 = vmul.f32 1.0, %v159
    %v161 = vtanh.pop %v150
    %163 = vrot.lane.b32.xlu0 %v93, 32
    %v164 = vpop.permute.xlu0 %163
    %v166 = vmul.f32 %v160, %v164
    %168 = vrot.lane.b32.xlu0 %v161, 64
    %v169 = vpop.permute.xlu0 %168
    %v171 = vmul.f32 %v160, %v169
    %173 = vrot.lane.b32.xlu0 %v171, 32
    %v174 = vpop.permute.xlu0 %173
    %v176 = vadd.f32 %v166, %v174
    %v177 = vtanh.pop %v176
    %179 = vrot.lane.b32.xlu0 %v177, 64
    %v180 = vpop.permute.xlu0 %179
    %v182 = vmul.f32 %v160, %v180
    %v183 = vpack.c.bf16 %v182, %v182
    %v184 = vld [vmem:[%s6] sm:$0xf]
    %v185 = vld [vmem:[%s6 + $0x4] sm:$0xf]
    %v186 = vld [vmem:[%s6 + $0x8] sm:$0xf]
    %v187 = vld [vmem:[%s6 + $0xc] sm:$0xf]
    %v188 = vld [vmem:[%s7] sm:$0x1]
    %190 = vrot.lane.b32.xlu0 %v183, 32
    %v191 = vpop.permute.xlu0 %190
    %v196 = vunpack.c.l.b16 %v184
    %v197 = vunpack.c.l.b16 %v185
    %v198 = vunpack.c.l.b16 %v186
    %v199 = vunpack.c.l.b16 %v187
    %v200 = vpack.c.b16 %v197, %v196
    %v201 = vpack.c.b16 %v199, %v198
    %v205 = vsel %vm111, %v191, 0
    %207 = vmatprep.subr.bf16.mxu0 0
    %208 = vmatpush1.bf16.msra.mxu0 0
    %209 = vmatprep.subr.bf16.mxu0 0
    %210 = vmatpush1.bf16.msra.mxu0 0
    %211 = vmatprep.subr.bf16.mxu0 0
    %212 = vmatpush1.bf16.msra.mxu0 0
    %213 = vmatprep.subr.bf16.mxu0 0
    %214 = vmatpush1.bf16.msra.mxu0 0
    %215 = vmatprep.subr.bf16.mxu0 0
    %216 = vmatpush1.bf16.msra.mxu0 0
    %217 = vmatprep.subr.bf16.mxu0 0
    %218 = vmatpush1.bf16.msra.mxu0 0
    %219 = vmatprep.subr.bf16.mxu0 0
    %220 = vmatpush1.bf16.msra.mxu0 %v201
    %221 = vmatprep.subr.bf16.mxu0 0
    %222 = vmatpush1.bf16.msra.mxu0 %v200
    %223 = vmatprep.subr.bf16.mxu0 0
    %224 = vmatpush2.bf16.msra.mxu0 0
    %225 = vmatprep.subr.bf16.mxu0 0
    %226 = vmatpush2.bf16.msra.mxu0 0
    %227 = vmatprep.subr.bf16.mxu0 0
    %228 = vmatpush2.bf16.msra.mxu0 0
    %229 = vmatprep.subr.bf16.mxu0 0
    %230 = vmatpush2.bf16.msra.mxu0 0
    %231 = vmatprep.subr.bf16.mxu0 0
    %232 = vmatpush2.bf16.msra.mxu0 0
    %233 = vmatprep.subr.bf16.mxu0 0
    %234 = vmatpush2.bf16.msra.mxu0 0
    %235 = vmatprep.subr.bf16.mxu0 0
    %236 = vmatpush2.bf16.msra.mxu0 0
    %237 = vmatprep.subr.bf16.mxu0 0
    %238 = vmatpush2.bf16.msra.mxu0 0
    %239 = vmatprep.mubr.bf16.mxu0 0
    %240 = vmatmul.mubr.bf16.gmra.mxu0 %v205
    %v241 = vpop.f32.mrf.mxu0
    %v242 = vadd.f32 %v188, %v241
    %v243 = vpop.f32.mrf.mxu0
    %v244 = vpop.f32.mrf.mxu0
    %v245 = vpop.f32.mrf.mxu0
    %246 = vdwg.mxu0
    %vm247 = vcmask 253952
    %248 = vst.msk [vmem:[#allocation3] sm:$0x1] %vm247, %v242
    %v250 = vrot.slane %v176, 7
    %251 = vrot.lane.b32.xlu0 %v250, 64
    %v252 = vpop.permute.xlu0 %251
    %vm254 = vcmask 1040384
    %v255 = vsel %vm254, %v182, %v252
    %257 = vrot.lane.b32.xlu0 %v255, 32
    %v258 = vpop.permute.xlu0 %257
    %vm260 = vcmask 254976
    %261 = vst.msk [vmem:[#allocation5] sm:$0x3] %vm260, %v258
    // Predicated region
    $region34: #{tpu_custom_call.1} parent=1 // pred_check
      _
    $region35: #{tpu_custom_call.1} parent=1 // pred_check_branch
      %263 = sbr.rel (0) target = $region37
    $region36: #{tpu_custom_call.1} parent=1 // pred_region
      %s265 = ssub.s32 16, 16
      %266 = vsyncadd [#allocation4], %s265
      %s268 = sshll.u32 [#allocation3], 4
      %s269 = int_to_ptr.vmem [resolvable:$true] %s268
      %271 = dma.vmem_to_hbm [thread:$0]  %s269, 16, %s8, [#allocation4]
    $region37: #{tpu_custom_call.1} parent=1 // pred_fallthru
      _
    // Predicated region
    $region38: #{tpu_custom_call.1} parent=1 // pred_check
      _
    $region39: #{tpu_custom_call.1} parent=1 // pred_check_branch
      %273 = sbr.rel (0) target = $region41
    $region40: #{tpu_custom_call.1} parent=1 // pred_region
      %s275 = ssub.s32 32, 32
      %276 = vsyncadd [#allocation6], %s275
      %s278 = sshll.u32 [#allocation5], 4
      %s279 = int_to_ptr.vmem [resolvable:$true] %s278
      %281 = dma.vmem_to_hbm [thread:$0]  %s279, 32, %s9, [#allocation6]
    $region41: #{tpu_custom_call.1} parent=1 // pred_fallthru
      _
    // Predicated region
    $region42: #{tpu_custom_call.1} parent=1 // pred_check
      _
    $region43: #{tpu_custom_call.1} parent=1 // pred_check_branch
      %283 = sbr.rel (0) target = $region45
    $region44: #{tpu_custom_call.1} parent=1 // pred_region
      %284 = dma.done [#allocation4], 16
    $region45: #{tpu_custom_call.1} parent=1 // pred_fallthru
      _
    // Predicated region
    $region46: #{tpu_custom_call.1} parent=1 // pred_check
      _
    $region47: #{tpu_custom_call.1} parent=1 // pred_check_branch
      %286 = sbr.rel (0) target = $region49
    $region48: #{tpu_custom_call.1} parent=1 // pred_region
      %287 = dma.done [#allocation6], 32
    $region49: #{tpu_custom_call.1} parent=1 // pred_fallthru
      _
    %288 = vsyncpa [#allocation4], 1
    %289 = vsyncpa [#allocation6], 1

</llo_original>
